<compile_context>
chip_gen: v7x
topology: tpu7x:2x2x1
jax: 0.10.0
libtpu: 0.0.40
codegen_flags: <defaults>
</compile_context>

<pallas_src>
import functools

import jax
import jax.numpy as jnp
from jax.experimental import pallas as pl
from jax.experimental.pallas import tpu as pltpu

TAU = 0.07
INV_TAU = 1.0 / TAU
EPS = 1e-12
NEG_INF = -1e30
MIB = 1024 * 1024
MIN_TILE_BYTES = 2 * MIB      # floor on the streamed-negatives DMA tile size


def _round_up(x, m):
    return (x + m - 1) // m * m


def _cdiv(a, b):
    return -(-a // b)


def _nce_kernel(q_ref, t_ref, n_ref,
                m_out_ref, s_out_ref, pos_out_ref,
                qhat_ref, pos_ref, m_ref, s_ref,
                *, n_valid, tn, tiles_per_core):
    """Grid = (core_split=2 'parallel', negatives tiles 'arbitrary')."""
    c = pl.program_id(0)
    j = pl.program_id(1)

    # ---- init (per core): q_hat = normalize(q)/tau, positive logit, LSE state ----
    @pl.when(j == 0)
    def _init():
        q = q_ref[...].astype(jnp.float32)
        t = t_ref[...].astype(jnp.float32)
        inv_q = jax.lax.rsqrt(jnp.sum(q * q, axis=1, keepdims=True) + EPS)
        inv_t = jax.lax.rsqrt(jnp.sum(t * t, axis=1, keepdims=True) + EPS)
        qh = q * (inv_q * INV_TAU)          # row norm + 1/tau folded into LHS once
        qhat_ref[...] = qh
        pos = jnp.sum(qh * (t * inv_t), axis=1, keepdims=True)
        pos_ref[...] = pos
        m_ref[...] = jnp.full_like(pos, NEG_INF)
        s_ref[...] = jnp.zeros_like(pos)

    # ---- per-tile negative logits (all math f32: v5e has no bf16 VPU/EUP) ----
    n = n_ref[...].astype(jnp.float32)                               # (TN, D)
    inv_n = jax.lax.rsqrt(jnp.sum(n * n, axis=1, keepdims=True) + EPS)
    n_hat = n * inv_n

    # Contract last dim of both operands -> no transpose/relayout of n_hat.
    logits = jax.lax.dot_general(
        qhat_ref[...], n_hat,
        dimension_numbers=(((1,), (1,)), ((), ())),
        preferred_element_type=jnp.float32)                          # (B, TN)

    # Mask ragged last tile / fully-out-of-range (clamped) overflow tiles.
    tile_idx = c * tiles_per_core + j
    col = tile_idx * tn + jax.lax.broadcasted_iota(jnp.int32, (1, tn), 1)
    logits = jnp.where(col < n_valid, logits, jnp.float32(NEG_INF))

    # ---- online logsumexp update ----
    m_prev = m_ref[...]
    m_new = jnp.maximum(m_prev, jnp.max(logits, axis=1, keepdims=True))
    s_ref[...] = s_ref[...] * jnp.exp(m_prev - m_new) + jnp.sum(
        jnp.exp(logits - m_new), axis=1, keepdims=True)
    m_ref[...] = m_new

    # ---- finalize: emit this core's partial (m, s) and the positive logit ----
    @pl.when(j == pl.num_programs(1) - 1)
    def _finalize():
        m_out_ref[...] = m_ref[...][None]
        s_out_ref[...] = s_ref[...][None]
        pos_out_ref[...] = pos_ref[...][None]


def nce_loss(query, target, negatives, *, max_tn=None):
    """query/target: (B, C, H, W); negatives: (N, C, H, W). Returns scalar f32."""
    b = query.shape[0]
    n_rows = negatives.shape[0]

    q2 = query.reshape(b, -1)          # keep native dtype (no wrapper upcast/pad)
    t2 = target.reshape(b, -1)
    n2 = negatives.reshape(n_rows, -1)
    d = q2.shape[1]
    itemsize = jnp.dtype(n2.dtype).itemsize

    # ---- generation-aware VMEM budgeting ----
    try:
        vmem_cap = int(pltpu.get_tpu_info().vmem_capacity_bytes)
        if vmem_cap <= 0:
            vmem_cap = 64 * MIB
    except Exception:
        vmem_cap = 64 * MIB            # conservative (v7x-sized) fallback

    # Per negatives row: double-buffered DMA tile + in-kernel f32 temporaries
    # (cast + n_hat) + (B, TN) logits/exp temporaries.
    f32_temp = 4 if itemsize >= 4 else 8
    bytes_per_neg_row = d * (2 * itemsize + f32_temp) + b * 16
    # Resident q/t blocks (double-buffered), q_hat scratch, small scratch, slack.
    resident_bytes = b * d * (4 * itemsize + 4) + 64 * 1024

    pipeline_cap = 32 * MIB if vmem_cap >= 100 * MIB else 20 * MIB
    pipeline_budget = max(4 * MIB, min(pipeline_cap, vmem_cap // 3) - resident_bytes)

    tn_cap = max(8, (pipeline_budget // bytes_per_neg_row) // 8 * 8)
    tn_floor = _round_up(_cdiv(MIN_TILE_BYTES, d * itemsize), 8)   # >= ~2 MiB DMA tile
    tn = min(max(tn_floor, 8), tn_cap)
    tn = min(tn, max(8, _round_up(_cdiv(n_rows, 2), 8)))           # <= half of N (2-way split)
    if max_tn is not None:
        tn = max(8, min(tn, _round_up(max_tn, 8)))
    tn = int(tn)

    tiles_total = _cdiv(n_rows, tn)
    tiles_per_core = _cdiv(tiles_total, 2)
    grid = (2, tiles_per_core)

    vmem_est = tn * bytes_per_neg_row + resident_bytes
    vmem_ceiling = 96 * MIB if vmem_cap >= 100 * MIB else 48 * MIB
    vmem_limit = int(min(vmem_ceiling, max(32 * MIB, int(1.5 * vmem_est))))

    kernel = functools.partial(_nce_kernel, n_valid=n_rows, tn=tn,
                               tiles_per_core=tiles_per_core)

    # Clamp overflow tile indices (odd tile count split across 2 cores) so the
    # DMA stays in bounds; the in-kernel col<n_valid mask discards that data.
    def neg_index_map(c, j):
        return (jnp.minimum(c * tiles_per_core + j, tiles_total - 1), 0)

    m_parts, s_parts, pos_parts = pl.pallas_call(
        kernel,
        out_shape=(
            jax.ShapeDtypeStruct((2, b, 1), jnp.float32),   # per-core running max
            jax.ShapeDtypeStruct((2, b, 1), jnp.float32),   # per-core running sum-exp
            jax.ShapeDtypeStruct((2, b, 1), jnp.float32),   # positive logit
        ),
        grid=grid,
        in_specs=[
            pl.BlockSpec((b, d), lambda c, j: (0, 0)),      # q: resident
            pl.BlockSpec((b, d), lambda c, j: (0, 0)),      # t: resident (tiny)
            pl.BlockSpec((tn, d), neg_index_map),           # negatives: streamed
        ],
        out_specs=(
            pl.BlockSpec((1, b, 1), lambda c, j: (c, 0, 0)),
            pl.BlockSpec((1, b, 1), lambda c, j: (c, 0, 0)),
            pl.BlockSpec((1, b, 1), lambda c, j: (c, 0, 0)),
        ),
        scratch_shapes=[
            pltpu.VMEM((b, d), jnp.float32),   # q_hat = normalize(q)/tau
            pltpu.VMEM((b, 1), jnp.float32),   # positive logit
            pltpu.VMEM((b, 1), jnp.float32),   # running max
            pltpu.VMEM((b, 1), jnp.float32),   # running sum of exp
        ],
        compiler_params=pltpu.CompilerParams(
            dimension_semantics=("parallel", "arbitrary"),
            vmem_limit_bytes=vmem_limit,
        ),
    )(q2, t2, n2)

    # Tiny JAX epilogue: merge the two partial LSEs with the positive logit.
    m = m_parts[:, :, 0]                       # (2, B)
    s = s_parts[:, :, 0]                       # (2, B)
    pos = pos_parts[0, :, 0]                   # (B,)
    m_all = jnp.maximum(jnp.max(m, axis=0), pos)
    s_all = jnp.sum(s * jnp.exp(m - m_all[None, :]), axis=0) + jnp.exp(pos - m_all)
    lse = m_all + jnp.log(s_all)
    return jnp.mean(lse - pos)


def _nce_loss_ref(query, target, negatives):
    """Pure-JAX reference mirroring the PyTorch module."""
    q = query.reshape(query.shape[0], -1).astype(jnp.float32)
    t = target.reshape(target.shape[0], -1).astype(jnp.float32)
    n = negatives.reshape(negatives.shape[0], -1).astype(jnp.float32)
    q = q * jax.lax.rsqrt(jnp.sum(q * q, axis=1, keepdims=True) + EPS)
    t = t * jax.lax.rsqrt(jnp.sum(t * t, axis=1, keepdims=True) + EPS)
    n = n * jax.lax.rsqrt(jnp.sum(n * n, axis=1, keepdims=True) + EPS)
    sim_pos = jnp.sum(q * t, axis=1, keepdims=True)
    sim_neg = q @ n.T
    logits = jnp.concatenate([sim_pos, sim_neg], axis=1) / TAU
    lse = jax.nn.logsumexp(logits, axis=1)
    return jnp.mean(lse - logits[:, 0])


if __name__ == "__main__":
    key = jax.random.PRNGKey(0)
    k1, k2, k3 = jax.random.split(key, 3)

    B, C, H, W = 8, 4, 4, 2      # flattened feature dim D = 32 (un-padded, full-dim block)
    N = 20                       # number of negatives (exercises ragged-tile mask)

    query = jax.random.normal(k1, (B, C, H, W), dtype=jnp.float32)
    target = jax.random.normal(k2, (B, C, H, W), dtype=jnp.float32)
    negatives = jax.random.normal(k3, (N, C, H, W), dtype=jnp.float32)

    ref = jax.block_until_ready(_nce_loss_ref(query, target, negatives))

    # Default (auto) tile path: one tile per core, ragged tail masked.
    loss = jax.block_until_ready(nce_loss(query, target, negatives))
    assert jnp.allclose(loss, ref, rtol=1e-5, atol=1e-5), (loss, ref)

    # Multi-tile streaming path (online LSE + overflow-tile clamping + masking).
    loss_tiled = jax.block_until_ready(nce_loss(query, target, negatives, max_tn=8))
    assert jnp.allclose(loss_tiled, ref, rtol=1e-5, atol=1e-5), (loss_tiled, ref)

    print("KERNEL_OK")
</pallas_src>

<mosaic_0001>
module attributes {stable_mosaic.version = 11 : i64} {
  func.func @_nce_kernel(%arg0: i32, %arg1: i32, %arg2: memref<8x32xf32, #tpu.memory_space<vmem>>, %arg3: memref<8x32xf32, #tpu.memory_space<vmem>>, %arg4: memref<16x32xf32, #tpu.memory_space<vmem>>, %arg5: memref<1x8x1xf32, #tpu.memory_space<vmem>>, %arg6: memref<1x8x1xf32, #tpu.memory_space<vmem>>, %arg7: memref<1x8x1xf32, #tpu.memory_space<vmem>>, %arg8: memref<8x32xf32, #tpu.memory_space<vmem>>, %arg9: memref<8x1xf32, #tpu.memory_space<vmem>>, %arg10: memref<8x1xf32, #tpu.memory_space<vmem>>, %arg11: memref<8x1xf32, #tpu.memory_space<vmem>>) attributes {dimension_semantics = [#tpu.dimension_semantics<parallel>, #tpu.dimension_semantics<arbitrary>], iteration_bounds = array<i64: 2, 1>, scalar_prefetch = 0 : i64, scratch_operands = 4 : i64, tpu.core_type = #tpu.core_type<tc>, window_params = [{pipeline_mode = #tpu.pipeline_mode<synchronous>, transform_indices = @transform_0, window_bounds = array<i64: 8, 32>}, {pipeline_mode = #tpu.pipeline_mode<synchronous>, transform_indices = @transform_1, window_bounds = array<i64: 8, 32>}, {transform_indices = @transform_2, window_bounds = array<i64: 16, 32>}, {transform_indices = @transform_3, window_bounds = array<i64: 1, 8, 1>}, {transform_indices = @transform_4, window_bounds = array<i64: 1, 8, 1>}, {transform_indices = @transform_5, window_bounds = array<i64: 1, 8, 1>}]} {
    %c0_i32 = arith.constant 0 : i32
    %0 = arith.cmpi eq, %arg1, %c0_i32 : i32
    %1 = arith.extui %0 : i1 to i32
    %c0_i32_0 = arith.constant 0 : i32
    %2 = arith.cmpi ne, %1, %c0_i32_0 : i32
    scf.if %2 {
      %c0_19 = arith.constant 0 : index
      %c0_20 = arith.constant 0 : index
      %45 = vector.load %arg2[%c0_19, %c0_20] : memref<8x32xf32, #tpu.memory_space<vmem>>, vector<8x32xf32>
      %c0_21 = arith.constant 0 : index
      %c0_22 = arith.constant 0 : index
      %46 = vector.load %arg3[%c0_21, %c0_22] : memref<8x32xf32, #tpu.memory_space<vmem>>, vector<8x32xf32>
      %47 = arith.mulf %45, %45 : vector<8x32xf32>
      %cst_23 = arith.constant dense<0.000000e+00> : vector<8xf32>
      %48 = vector.multi_reduction <add>, %47, %cst_23 [1] : vector<8x32xf32> to vector<8xf32>
      %49 = vector.shape_cast %48 : vector<8xf32> to vector<8x1xf32>
      %cst_24 = arith.constant 9.99999996E-13 : f32
      %50 = vector.broadcast %cst_24 : f32 to vector<8x1xf32>
      %51 = arith.addf %49, %50 : vector<8x1xf32>
      %52 = math.rsqrt %51 : vector<8x1xf32>
      %53 = arith.mulf %46, %46 : vector<8x32xf32>
      %cst_25 = arith.constant dense<0.000000e+00> : vector<8xf32>
      %54 = vector.multi_reduction <add>, %53, %cst_25 [1] : vector<8x32xf32> to vector<8xf32>
      %55 = vector.shape_cast %54 : vector<8xf32> to vector<8x1xf32>
      %cst_26 = arith.constant 9.99999996E-13 : f32
      %56 = vector.broadcast %cst_26 : f32 to vector<8x1xf32>
      %57 = arith.addf %55, %56 : vector<8x1xf32>
      %58 = math.rsqrt %57 : vector<8x1xf32>
      %cst_27 = arith.constant 14.2857141 : f32
      %59 = vector.broadcast %cst_27 : f32 to vector<8x1xf32>
      %60 = arith.mulf %52, %59 : vector<8x1xf32>
      %61 = vector.broadcast %60 : vector<8x1xf32> to vector<8x32xf32>
      %62 = arith.mulf %45, %61 : vector<8x32xf32>
      %c0_28 = arith.constant 0 : index
      %c0_29 = arith.constant 0 : index
      %63 = vector.load %arg8[%c0_28, %c0_29] : memref<8x32xf32, #tpu.memory_space<vmem>>, vector<8x32xf32>
      tpu.vector_store %arg8[%c0_28, %c0_29], %62 {strides = array<i32>} : memref<8x32xf32, #tpu.memory_space<vmem>>, vector<8x32xf32>,
      %64 = vector.broadcast %58 : vector<8x1xf32> to vector<8x32xf32>
      %65 = arith.mulf %46, %64 : vector<8x32xf32>
      %66 = arith.mulf %62, %65 : vector<8x32xf32>
      %cst_30 = arith.constant dense<0.000000e+00> : vector<8xf32>
      %67 = vector.multi_reduction <add>, %66, %cst_30 [1] : vector<8x32xf32> to vector<8xf32>
      %68 = vector.shape_cast %67 : vector<8xf32> to vector<8x1xf32>
      %c0_31 = arith.constant 0 : index
      %c0_32 = arith.constant 0 : index
      %69 = vector.load %arg9[%c0_31, %c0_32] : memref<8x1xf32, #tpu.memory_space<vmem>>, vector<8x1xf32>
      tpu.vector_store %arg9[%c0_31, %c0_32], %68 {strides = array<i32>} : memref<8x1xf32, #tpu.memory_space<vmem>>, vector<8x1xf32>,
      %cst_33 = arith.constant -1.000000e+30 : f32
      %70 = vector.broadcast %cst_33 : f32 to vector<8x1xf32>
      %c0_34 = arith.constant 0 : index
      %c0_35 = arith.constant 0 : index
      %71 = vector.load %arg10[%c0_34, %c0_35] : memref<8x1xf32, #tpu.memory_space<vmem>>, vector<8x1xf32>
      tpu.vector_store %arg10[%c0_34, %c0_35], %70 {strides = array<i32>} : memref<8x1xf32, #tpu.memory_space<vmem>>, vector<8x1xf32>,
      %cst_36 = arith.constant 0.000000e+00 : f32
      %72 = vector.broadcast %cst_36 : f32 to vector<8x1xf32>
      %c0_37 = arith.constant 0 : index
      %c0_38 = arith.constant 0 : index
      %73 = vector.load %arg11[%c0_37, %c0_38] : memref<8x1xf32, #tpu.memory_space<vmem>>, vector<8x1xf32>
      tpu.vector_store %arg11[%c0_37, %c0_38], %72 {strides = array<i32>} : memref<8x1xf32, #tpu.memory_space<vmem>>, vector<8x1xf32>,
    } else {
    }
    %c0 = arith.constant 0 : index
    %c0_1 = arith.constant 0 : index
    %3 = vector.load %arg4[%c0, %c0_1] : memref<16x32xf32, #tpu.memory_space<vmem>>, vector<16x32xf32>
    %4 = arith.mulf %3, %3 : vector<16x32xf32>
    %cst = arith.constant dense<0.000000e+00> : vector<16xf32>
    %5 = vector.multi_reduction <add>, %4, %cst [1] : vector<16x32xf32> to vector<16xf32>
    %6 = vector.shape_cast %5 : vector<16xf32> to vector<16x1xf32>
    %cst_2 = arith.constant 9.99999996E-13 : f32
    %7 = vector.broadcast %cst_2 : f32 to vector<16x1xf32>
    %8 = arith.addf %6, %7 : vector<16x1xf32>
    %9 = math.rsqrt %8 : vector<16x1xf32>
    %10 = vector.broadcast %9 : vector<16x1xf32> to vector<16x32xf32>
    %11 = arith.mulf %3, %10 : vector<16x32xf32>
    %c0_3 = arith.constant 0 : index
    %c0_4 = arith.constant 0 : index
    %12 = vector.load %arg8[%c0_3, %c0_4] : memref<8x32xf32, #tpu.memory_space<vmem>>, vector<8x32xf32>
    %cst_5 = arith.constant dense<0.000000e+00> : vector<8x16xf32>
    %13 = tpu.matmul %12, %11, %cst_5 {dimension_numbers = #tpu.dot_dimension_numbers<[1], [1], [0], [0], [0, 0, 1, 0], [], []>} : vector<8x32xf32>, vector<16x32xf32>, vector<8x16xf32> -> vector<8x16xf32>
    %c1_i32 = arith.constant 1 : i32
    %14 = arith.muli %arg0, %c1_i32 : i32
    %15 = arith.addi %14, %arg1 : i32
    %c16_i32 = arith.constant 16 : i32
    %16 = arith.muli %15, %c16_i32 : i32
    %17 = tpu.iota {dimensions = array<i32: 1>} : vector<1x16xi32>
    %18 = vector.broadcast %16 : i32 to vector<1x16xi32>
    %19 = arith.addi %18, %17 : vector<1x16xi32>
    %c20_i32 = arith.constant 20 : i32
    %20 = vector.broadcast %c20_i32 : i32 to vector<1x16xi32>
    %21 = arith.cmpi slt, %19, %20 : vector<1x16xi32>
    %cst_6 = arith.constant -1.000000e+30 : f32
    %22 = vector.shape_cast %21 : vector<1x16xi1> to vector<1x16xi1>
    %23 = vector.broadcast %22 : vector<1x16xi1> to vector<8x16xi1>
    %24 = vector.broadcast %cst_6 : f32 to vector<8x16xf32>
    %25 = arith.select %23, %13, %24 : vector<8x16xi1>, vector<8x16xf32>
    %c0_7 = arith.constant 0 : index
    %c0_8 = arith.constant 0 : index
    %26 = vector.load %arg10[%c0_7, %c0_8] : memref<8x1xf32, #tpu.memory_space<vmem>>, vector<8x1xf32>
    %cst_9 = arith.constant dense<0xFF800000> : vector<8xf32>
    %27 = vector.multi_reduction <maximumf>, %25, %cst_9 [1] : vector<8x16xf32> to vector<8xf32>
    %28 = vector.shape_cast %27 : vector<8xf32> to vector<8x1xf32>
    %29 = arith.maximumf %26, %28 : vector<8x1xf32>
    %c0_10 = arith.constant 0 : index
    %c0_11 = arith.constant 0 : index
    %30 = vector.load %arg11[%c0_10, %c0_11] : memref<8x1xf32, #tpu.memory_space<vmem>>, vector<8x1xf32>
    %31 = arith.subf %26, %29 : vector<8x1xf32>
    %32 = math.exp %31 : vector<8x1xf32>
    %33 = arith.mulf %30, %32 : vector<8x1xf32>
    %34 = vector.broadcast %29 : vector<8x1xf32> to vector<8x16xf32>
    %35 = arith.subf %25, %34 : vector<8x16xf32>
    %36 = math.exp %35 : vector<8x16xf32>
    %cst_12 = arith.constant dense<0.000000e+00> : vector<8xf32>
    %37 = vector.multi_reduction <add>, %36, %cst_12 [1] : vector<8x16xf32> to vector<8xf32>
    %38 = vector.shape_cast %37 : vector<8xf32> to vector<8x1xf32>
    %39 = arith.addf %33, %38 : vector<8x1xf32>
    %c0_13 = arith.constant 0 : index
    %c0_14 = arith.constant 0 : index
    %40 = vector.load %arg11[%c0_13, %c0_14] : memref<8x1xf32, #tpu.memory_space<vmem>>, vector<8x1xf32>
    tpu.vector_store %arg11[%c0_13, %c0_14], %39 {strides = array<i32>} : memref<8x1xf32, #tpu.memory_space<vmem>>, vector<8x1xf32>,
    %c0_15 = arith.constant 0 : index
    %c0_16 = arith.constant 0 : index
    %41 = vector.load %arg10[%c0_15, %c0_16] : memref<8x1xf32, #tpu.memory_space<vmem>>, vector<8x1xf32>
    tpu.vector_store %arg10[%c0_15, %c0_16], %29 {strides = array<i32>} : memref<8x1xf32, #tpu.memory_space<vmem>>, vector<8x1xf32>,
    %c0_i32_17 = arith.constant 0 : i32
    %42 = arith.cmpi eq, %arg1, %c0_i32_17 : i32
    %43 = arith.extui %42 : i1 to i32
    %c0_i32_18 = arith.constant 0 : i32
    %44 = arith.cmpi ne, %43, %c0_i32_18 : i32
    scf.if %44 {
      %c0_19 = arith.constant 0 : index
      %c0_20 = arith.constant 0 : index
      %45 = vector.load %arg10[%c0_19, %c0_20] : memref<8x1xf32, #tpu.memory_space<vmem>>, vector<8x1xf32>
      %46 = vector.shape_cast %45 : vector<8x1xf32> to vector<1x8x1xf32>
      %c0_21 = arith.constant 0 : index
      %c0_22 = arith.constant 0 : index
      %c0_23 = arith.constant 0 : index
      %47 = vector.load %arg5[%c0_21, %c0_22, %c0_23] : memref<1x8x1xf32, #tpu.memory_space<vmem>>, vector<1x8x1xf32>
      tpu.vector_store %arg5[%c0_21, %c0_22, %c0_23], %46 {strides = array<i32>} : memref<1x8x1xf32, #tpu.memory_space<vmem>>, vector<1x8x1xf32>,
      %c0_24 = arith.constant 0 : index
      %c0_25 = arith.constant 0 : index
      %48 = vector.load %arg11[%c0_24, %c0_25] : memref<8x1xf32, #tpu.memory_space<vmem>>, vector<8x1xf32>
      %49 = vector.shape_cast %48 : vector<8x1xf32> to vector<1x8x1xf32>
      %c0_26 = arith.constant 0 : index
      %c0_27 = arith.constant 0 : index
      %c0_28 = arith.constant 0 : index
      %50 = vector.load %arg6[%c0_26, %c0_27, %c0_28] : memref<1x8x1xf32, #tpu.memory_space<vmem>>, vector<1x8x1xf32>
      tpu.vector_store %arg6[%c0_26, %c0_27, %c0_28], %49 {strides = array<i32>} : memref<1x8x1xf32, #tpu.memory_space<vmem>>, vector<1x8x1xf32>,
      %c0_29 = arith.constant 0 : index
      %c0_30 = arith.constant 0 : index
      %51 = vector.load %arg9[%c0_29, %c0_30] : memref<8x1xf32, #tpu.memory_space<vmem>>, vector<8x1xf32>
      %52 = vector.shape_cast %51 : vector<8x1xf32> to vector<1x8x1xf32>
      %c0_31 = arith.constant 0 : index
      %c0_32 = arith.constant 0 : index
      %c0_33 = arith.constant 0 : index
      %53 = vector.load %arg7[%c0_31, %c0_32, %c0_33] : memref<1x8x1xf32, #tpu.memory_space<vmem>>, vector<1x8x1xf32>
      tpu.vector_store %arg7[%c0_31, %c0_32, %c0_33], %52 {strides = array<i32>} : memref<1x8x1xf32, #tpu.memory_space<vmem>>, vector<1x8x1xf32>,
    } else {
    }
    return
  }
  func.func @transform_0(%arg0: i32, %arg1: i32) -> (i32, i32) {
    %c0_i32 = arith.constant 0 : i32
    %c0_i32_0 = arith.constant 0 : i32
    %c0_i32_1 = arith.constant 0 : i32
    return %c0_i32, %c0_i32_0 : i32, i32
  }
  func.func @transform_1(%arg0: i32, %arg1: i32) -> (i32, i32) {
    %c0_i32 = arith.constant 0 : i32
    %c0_i32_0 = arith.constant 0 : i32
    %c0_i32_1 = arith.constant 0 : i32
    return %c0_i32, %c0_i32_0 : i32, i32
  }
  func.func @transform_2(%arg0: i32, %arg1: i32) -> (i32, i32) {
    %c1_i32 = arith.constant 1 : i32
    %0 = arith.muli %arg0, %c1_i32 : i32
    %1 = arith.addi %0, %arg1 : i32
    %c1_i32_0 = arith.constant 1 : i32
    %2 = arith.minsi %1, %c1_i32_0 : i32
    %c0_i32 = arith.constant 0 : i32
    %c0_i32_1 = arith.constant 0 : i32
    return %2, %c0_i32 : i32, i32
  }
  func.func @transform_3(%arg0: i32, %arg1: i32) -> (i32, i32, i32) {
    %c0_i32 = arith.constant 0 : i32
    %c0_i32_0 = arith.constant 0 : i32
    %c0_i32_1 = arith.constant 0 : i32
    return %arg0, %c0_i32, %c0_i32_0 : i32, i32, i32
  }
  func.func @transform_4(%arg0: i32, %arg1: i32) -> (i32, i32, i32) {
    %c0_i32 = arith.constant 0 : i32
    %c0_i32_0 = arith.constant 0 : i32
    %c0_i32_1 = arith.constant 0 : i32
    return %arg0, %c0_i32, %c0_i32_0 : i32, i32, i32
  }
  func.func @transform_5(%arg0: i32, %arg1: i32) -> (i32, i32, i32) {
    %c0_i32 = arith.constant 0 : i32
    %c0_i32_0 = arith.constant 0 : i32
    %c0_i32_1 = arith.constant 0 : i32
    return %arg0, %c0_i32, %c0_i32_0 : i32, i32, i32
  }
}

</mosaic_0001>

<llo_original>
// kernel: tpu_custom_call.1
$region0: #{tpu_custom_call.1}
  #allocation0 [shape = 'u32[]', space=smem, size = 0x4, offset = 0x4, fixed_abs, tag = 'smem constant byte address 0x4 - core index']
  #allocation1 [shape = 'u32[144,128]{1,0:T(1,128)}', space=vmem, size = 0x12000, scoped, tag = 'internal scratch']
  #allocation2 [shape = 'f32[8,32]{1,0:T(8,128)}', space=vmem, size = 0x1000, scoped, tag = 'scratch operand']
  #allocation3 [shape = 'f32[8,1]{1,0:T(8,128)}', space=vmem, size = 0x1000, scoped, tag = 'scratch operand']
  #allocation4 [shape = 'f32[8,1]{1,0:T(8,128)}', space=vmem, size = 0x1000, scoped, tag = 'scratch operand']
  #allocation5 [shape = 'f32[8,1]{1,0:T(8,128)}', space=vmem, size = 0x1000, scoped, tag = 'scratch operand']
  %s0 = inlined_call_operand.hbm [shape: f32[8,32], index: 0, kind: input, shape index: {}]
  %s1 = inlined_call_operand.hbm [shape: f32[8,32], index: 1, kind: input, shape index: {}]
  %s2 = inlined_call_operand.hbm [shape: f32[20,32], index: 2, kind: input, shape index: {}]
  %s3 = inlined_call_operand.vmem [shape: f32[2,8,1], index: 3, kind: output, shape index: {0}]
  %s4 = inlined_call_operand.vmem [shape: f32[2,8,1], index: 4, kind: output, shape index: {1}]
  %s5 = inlined_call_operand.vmem [shape: f32[2,8,1], index: 5, kind: output, shape index: {2}]
  %6 = xla_tuple %s3, %s4, %s5
  %s7 = sld [smem:[#allocation0]]
  $region81: #{tpu_custom_call.1} parent=0
    _
  %s9 = ssub.s32 1, %s7
  %s10 = scalar_select 0, %s9, %s7
  $region1: #{tpu_custom_call.1} parent=0
    #allocation6 [shape = 'u8[4096]{0}', space=vmem, size = 0x1000, scoped, tag = 'input window, operand 0, single buffered']
    #allocation7 [shape = 's32[2]{0}', space=sflag, size = 0x8, scoped, tag = 'scoped memory for tpu_custom_call.1']
    #allocation8 [shape = 'u8[4096]{0}', space=vmem, size = 0x1000, scoped, tag = 'input window, operand 1, single buffered']
    #allocation9 [shape = 's32[1]{0}', space=sflag, size = 0x4, scoped, tag = 'scoped memory for tpu_custom_call.1']
    #allocation10 [shape = 'u8[16384]{0}', space=vmem, size = 0x4000, scoped, tag = 'input window, operand 2']
    %11 = vsyncpa [#allocation7], 0
    %12 = vsyncpa [#allocation9], 0
    loop: start=0, step=1, limit=4
    $region2: #{tpu_custom_call.1} parent=1 // loop_pre_header
      _
    $region3: #{tpu_custom_call.1} parent=1 // loop_header
      %s14 = sphi 0, %s18
      %p15 = scmp.ge.s32.totalorder %s14, 4
      %s21 = sphi 0, %s33
      %s22 = sphi 0, %s29
      %s23 = sphi 0, %s21
      %s24 = sphi 0, %s22
      %s25 = sphi 0, %s23
      %s26 = sphi 0, %s24
      %s34 = sphi 0, %s34
      %s36 = sphi 0, %s34
      %s37 = sphi 0, %s36
      %s51 = sphi 0, %s37
      %s55 = sphi 0, %s55
      %s57 = sphi 0, %s55
      %s58 = sphi 0, %s57
      %s72 = sphi 0, %s58
      %s84 = sphi 0, %s86
      %s87 = sphi 0, %s84
      %s88 = sphi 0, %s87
      %s104 = sphi 0, %s88
      %s110 = sphi 0, %s112
      %s113 = sphi 0, %s110
      %s114 = sphi 0, %s113
      %s130 = sphi 0, %s114
      %s136 = sphi 0, %s138
      %s139 = sphi 0, %s136
      %s140 = sphi 0, %s139
      %s156 = sphi 0, %s140
      %s162 = sphi 0, %s164
      %s165 = sphi 0, %s162
      %s166 = sphi 0, %s165
      %s182 = sphi 0, %s166
    $region4: #{tpu_custom_call.1} parent=1 // loop_header_branch
      %17 = sbr.rel (%p15) target = $region8
    $region5: #{tpu_custom_call.1} parent=1 // loop_body
      %s19 = ssub.s32 %s14, 1
      %s20 = ssub.s32 %s14, 2
      %s27 = sadd.s32 1, %s22
      %p28 = scmp.ge.s32.totalorder %s27, 1
      %s29 = scalar_select %p28, 0, %s27
      %s30 = sadd.s32 1, %s21
      %s31 = scalar_select %p28, %s30, %s21
      %p32 = scmp.ge.s32.totalorder %s31, 2
      %s33 = scalar_select %p32, 0, %s31
      %s35 = sadd.s32 %s34, 1
      %p38 = scmp.eq.s32.totalorder %s14, 1
      %p39 = scmp.ne.s32.totalorder %s34, %s36
      %p40 = scmp.eq.s32.totalorder %s14, 0
      %p41 = por %p39, %p40
      %p42 = scmp.ne.s32.totalorder %s34, %s36
      %p43 = scmp.eq.s32.totalorder %s19, 1
      %p44 = por %p42, %p43
      %p45 = scmp.ne.s32.totalorder %s36, %s37
      %p46 = scmp.eq.s32.totalorder %s19, 0
      %p47 = por %p45, %p46
      %p48 = scmp.ne.s32.totalorder %s36, %s37
      %p49 = scmp.eq.s32.totalorder %s20, 1
      %p50 = por %p48, %p49
      %p52 = scmp.ne.s32.totalorder %s37, %s51
      %p53 = scmp.eq.s32.totalorder %s20, 0
      %p54 = por %p52, %p53
      %s56 = sadd.s32 %s55, 1
      %p59 = scmp.eq.s32.totalorder %s14, 1
      %p60 = scmp.ne.s32.totalorder %s55, %s57
      %p61 = scmp.eq.s32.totalorder %s14, 0
      %p62 = por %p60, %p61
      %p63 = scmp.ne.s32.totalorder %s55, %s57
      %p64 = scmp.eq.s32.totalorder %s19, 1
      %p65 = por %p63, %p64
      %p66 = scmp.ne.s32.totalorder %s57, %s58
      %p67 = scmp.eq.s32.totalorder %s19, 0
      %p68 = por %p66, %p67
      %p69 = scmp.ne.s32.totalorder %s57, %s58
      %p70 = scmp.eq.s32.totalorder %s20, 1
      %p71 = por %p69, %p70
      %p73 = scmp.ne.s32.totalorder %s58, %s72
      %p74 = scmp.eq.s32.totalorder %s20, 0
      %p75 = por %p73, %p74
      %s76 = sadd.s32 %s21, %s22
      %p77 = scmp.lt.s32.totalorder %s76, 1
      %s78 = scalar_select %p77, %s76, 1
      %s79 = sadd.s32 %s33, %s29
      %p80 = scmp.lt.s32.totalorder %s79, 1
      %s81 = scalar_select %p80, %s79, 1
      %s82 = ssub.s32 %s78, %s81
      %p83 = scmp.eq.s32.totalorder %s82, 0
      %s85 = sadd.s32 %s84, 1
      %s86 = scalar_select %p83, %s84, %s85
      %p89 = pneg %p83
      %p90 = scmp.eq.s32.totalorder %s14, 1
      %p91 = por %p89, %p90
      %p92 = scmp.ne.s32.totalorder %s84, %s87
      %p93 = scmp.eq.s32.totalorder %s14, 0
      %p94 = por %p92, %p93
      %p95 = scmp.ne.s32.totalorder %s84, %s87
      %p96 = scmp.eq.s32.totalorder %s19, 1
      %p97 = por %p95, %p96
      %p98 = scmp.ne.s32.totalorder %s87, %s88
      %p99 = scmp.eq.s32.totalorder %s19, 0
      %p100 = por %p98, %p99
      %p101 = scmp.ne.s32.totalorder %s87, %s88
      %p102 = scmp.eq.s32.totalorder %s20, 1
      %p103 = por %p101, %p102
      %p105 = scmp.ne.s32.totalorder %s88, %s104
      %p106 = scmp.eq.s32.totalorder %s20, 0
      %p107 = por %p105, %p106
      %s108 = ssub.s32 %s21, %s33
      %p109 = scmp.eq.s32.totalorder %s108, 0
      %s111 = sadd.s32 %s110, 1
      %s112 = scalar_select %p109, %s110, %s111
      %p115 = pneg %p109
      %p116 = scmp.eq.s32.totalorder %s14, 1
      %p117 = por %p115, %p116
      %p118 = scmp.ne.s32.totalorder %s110, %s113
      %p119 = scmp.eq.s32.totalorder %s14, 0
      %p120 = por %p118, %p119
      %p121 = scmp.ne.s32.totalorder %s110, %s113
      %p122 = scmp.eq.s32.totalorder %s19, 1
      %p123 = por %p121, %p122
      %p124 = scmp.ne.s32.totalorder %s113, %s114
      %p125 = scmp.eq.s32.totalorder %s19, 0
      %p126 = por %p124, %p125
      %p127 = scmp.ne.s32.totalorder %s113, %s114
      %p128 = scmp.eq.s32.totalorder %s20, 1
      %p129 = por %p127, %p128
      %p131 = scmp.ne.s32.totalorder %s114, %s130
      %p132 = scmp.eq.s32.totalorder %s20, 0
      %p133 = por %p131, %p132
      %s134 = ssub.s32 %s21, %s33
      %p135 = scmp.eq.s32.totalorder %s134, 0
      %s137 = sadd.s32 %s136, 1
      %s138 = scalar_select %p135, %s136, %s137
      %p141 = pneg %p135
      %p142 = scmp.eq.s32.totalorder %s14, 1
      %p143 = por %p141, %p142
      %p144 = scmp.ne.s32.totalorder %s136, %s139
      %p145 = scmp.eq.s32.totalorder %s14, 0
      %p146 = por %p144, %p145
      %p147 = scmp.ne.s32.totalorder %s136, %s139
      %p148 = scmp.eq.s32.totalorder %s19, 1
      %p149 = por %p147, %p148
      %p150 = scmp.ne.s32.totalorder %s139, %s140
      %p151 = scmp.eq.s32.totalorder %s19, 0
      %p152 = por %p150, %p151
      %p153 = scmp.ne.s32.totalorder %s139, %s140
      %p154 = scmp.eq.s32.totalorder %s20, 1
      %p155 = por %p153, %p154
      %p157 = scmp.ne.s32.totalorder %s140, %s156
      %p158 = scmp.eq.s32.totalorder %s20, 0
      %p159 = por %p157, %p158
      %s160 = ssub.s32 %s21, %s33
      %p161 = scmp.eq.s32.totalorder %s160, 0
      %s163 = sadd.s32 %s162, 1
      %s164 = scalar_select %p161, %s162, %s163
      %p167 = pneg %p161
      %p168 = scmp.eq.s32.totalorder %s14, 1
      %p169 = por %p167, %p168
      %p170 = scmp.ne.s32.totalorder %s162, %s165
      %p171 = scmp.eq.s32.totalorder %s14, 0
      %p172 = por %p170, %p171
      %p173 = scmp.ne.s32.totalorder %s162, %s165
      %p174 = scmp.eq.s32.totalorder %s19, 1
      %p175 = por %p173, %p174
      %p176 = scmp.ne.s32.totalorder %s165, %s166
      %p177 = scmp.eq.s32.totalorder %s19, 0
      %p178 = por %p176, %p177
      %p179 = scmp.ne.s32.totalorder %s165, %s166
      %p180 = scmp.eq.s32.totalorder %s20, 1
      %p181 = por %p179, %p180
      %p183 = scmp.ne.s32.totalorder %s166, %s182
      %p184 = scmp.eq.s32.totalorder %s20, 0
      %p185 = por %p183, %p184
      %p186 = scmp.le.s32.totalorder 1, %s14
      %p187 = scmp.lt.s32.totalorder %s14, 3
      %p188 = pnand %p186, %p187
      %p189 = pneg %p188
      // Predicated region
      $region9: #{tpu_custom_call.1} parent=5 // pred_check
        _
      $region10: #{tpu_custom_call.1} parent=5 // pred_check_branch
        %191 = sbr.rel (%p188) target = $region12
      $region11: #{tpu_custom_call.1} parent=5 // pred_region
        %s192 = ssub.s32 %s14, 1
        // Predicated region
        $region13: #{tpu_custom_call.1} parent=11 // pred_check
          %p193 = pneg %p47
        $region14: #{tpu_custom_call.1} parent=11 // pred_check_branch
          %195 = sbr.rel (%p193) target = $region16
        $region15: #{tpu_custom_call.1} parent=11 // pred_region
          %s197 = ssub.s32 128, 128
          %198 = vsyncadd [#allocation7], %s197
          %s200 = sshll.u32 [#allocation6], 4
          %s201 = int_to_ptr.vmem [resolvable:$true] %s200
          %203 = dma.hbm_to_vmem [thread:$0]  %s0, 128, %s201, [#allocation7]
        $region16: #{tpu_custom_call.1} parent=11 // pred_fallthru
          _
        // Predicated region
        $region17: #{tpu_custom_call.1} parent=11 // pred_check
          %p204 = pneg %p68
        $region18: #{tpu_custom_call.1} parent=11 // pred_check_branch
          %206 = sbr.rel (%p204) target = $region20
        $region19: #{tpu_custom_call.1} parent=11 // pred_region
          %s208 = ssub.s32 128, 128
          %209 = vsyncadd [#allocation9], %s208
          %s211 = sshll.u32 [#allocation8], 4
          %s212 = int_to_ptr.vmem [resolvable:$true] %s211
          %214 = dma.hbm_to_vmem [thread:$0]  %s1, 128, %s212, [#allocation9]
        $region20: #{tpu_custom_call.1} parent=11 // pred_fallthru
          _
      $region12: #{tpu_custom_call.1} parent=5 // pred_fallthru
        _
      %p215 = scmp.lt.s32.totalorder %s14, 2
      // Predicated region
      $region21: #{tpu_custom_call.1} parent=5 // pred_check
        %p216 = pneg %p215
      $region22: #{tpu_custom_call.1} parent=5 // pred_check_branch
        %218 = sbr.rel (%p216) target = $region24
      $region23: #{tpu_custom_call.1} parent=5 // pred_region
        // Predicated region
        $region25: #{tpu_custom_call.1} parent=23 // pred_check
          %p219 = pneg %p94
        $region26: #{tpu_custom_call.1} parent=23 // pred_check_branch
          %221 = sbr.rel (%p219) target = $region28
        $region27: #{tpu_custom_call.1} parent=23 // pred_region
          %s222 = sand.u32 %s14, 1
          %s223 = scalar_lea.sflag [#allocation7], %s222
          %s224 = sand.u32 %s84, 1
          %s225 = smul.addr %s224, 16
          %s226 = scalar_lea.vmem [#allocation10], %s225
          %s227 = sadd.s32 %s21, %s22
          %p228 = scmp.lt.s32.totalorder %s227, 1
          %s229 = scalar_select %p228, %s227, 1
          %s230 = smul.u32 2, %s229
          %s231 = ssub.s32 3, %s230
          %p232 = scmp.lt.s32.totalorder %s231, 2
          %s233 = scalar_select %p232, %s231, 2
          %s234 = smul.u32 128, %s233
          %s236 = ssub.s32 256, %s234
          %237 = vsyncadd %s223, %s236
          %p238 = scmp.ne.s32.totalorder 0, %s234
          %s239 = smul.addr %s230, 128
          %s240 = scalar_lea.hbm %s2, %s239
          %s241 = smul.u32 8, %s233
          %s242 = sshll.u32 %s226, 4
          %s243 = int_to_ptr.vmem [resolvable:$true] %s242
          %s244 = sshll.u32 %s241, 4
          %248 = dma.hbm_to_vmem [thread:$0]  (%p238), %s240, %s244, %s243, %s223, 128, 128, 8
        $region28: #{tpu_custom_call.1} parent=23 // pred_fallthru
          _
      $region24: #{tpu_custom_call.1} parent=5 // pred_fallthru
        _
      %p249 = scmp.le.s32.totalorder 1, %s14
      %p250 = scmp.lt.s32.totalorder %s14, 3
      %p251 = pnand %p249, %p250
      %p252 = pneg %p251
      // Predicated region
      $region29: #{tpu_custom_call.1} parent=5 // pred_check
        _
      $region30: #{tpu_custom_call.1} parent=5 // pred_check_branch
        %254 = sbr.rel (%p251) target = $region32
      $region31: #{tpu_custom_call.1} parent=5 // pred_region
        %s255 = ssub.s32 %s14, 1
        // Predicated region
        $region33: #{tpu_custom_call.1} parent=31 // pred_check
          %p256 = pneg %p47
        $region34: #{tpu_custom_call.1} parent=31 // pred_check_branch
          %258 = sbr.rel (%p256) target = $region36
        $region35: #{tpu_custom_call.1} parent=31 // pred_region
          %259 = dma.done [#allocation7], 128
        $region36: #{tpu_custom_call.1} parent=31 // pred_fallthru
          _
        // Predicated region
        $region37: #{tpu_custom_call.1} parent=31 // pred_check
          %p260 = pneg %p68
        $region38: #{tpu_custom_call.1} parent=31 // pred_check_branch
          %262 = sbr.rel (%p260) target = $region40
        $region39: #{tpu_custom_call.1} parent=31 // pred_region
          %263 = dma.done [#allocation9], 128
        $region40: #{tpu_custom_call.1} parent=31 // pred_fallthru
          _
        %s264 = sand.u32 %s19, 1
        %s265 = scalar_lea.sflag [#allocation7], %s264
        %s266 = sand.u32 %s87, 1
        %s267 = smul.addr %s266, 16
        %s268 = scalar_lea.vmem [#allocation10], %s267
        // Predicated region
        $region41: #{tpu_custom_call.1} parent=31 // pred_check
          %p269 = pneg %p100
        $region42: #{tpu_custom_call.1} parent=31 // pred_check_branch
          %271 = sbr.rel (%p269) target = $region44
        $region43: #{tpu_custom_call.1} parent=31 // pred_region
          %272 = dma.done %s265, 256
        $region44: #{tpu_custom_call.1} parent=31 // pred_fallthru
          _
        %p273 = pneg %p47
        %p274 = pneg %p44
        %p275 = pneg %p68
        %p276 = pneg %p65
        %s277 = sand.u32 %s19, 1
        %s278 = scalar_lea.sflag [#allocation7], %s277
        %s279 = sand.u32 %s87, 1
        %s280 = smul.addr %s279, 16
        %s281 = scalar_lea.vmem [#allocation10], %s280
        %p282 = pneg %p100
        %p283 = pneg %p97
        %p284 = pneg %p126
        %p285 = pneg %p123
        %p286 = scmp.lt.s32.totalorder %s23, 1
        %s287 = scalar_select %p286, %s23, 1
        %s288 = smul.addr %s287, 8
        %s289 = scalar_lea.vmem %s3, %s288
        %p290 = pneg %p152
        %p291 = pneg %p149
        %p292 = scmp.lt.s32.totalorder %s23, 1
        %s293 = scalar_select %p292, %s23, 1
        %s294 = smul.addr %s293, 8
        %s295 = scalar_lea.vmem %s4, %s294
        %p296 = pneg %p178
        %p297 = pneg %p175
        %p298 = scmp.lt.s32.totalorder %s23, 1
        %s299 = scalar_select %p298, %s23, 1
        %s300 = smul.addr %s299, 8
        %s301 = scalar_lea.vmem %s5, %s300
        %s302 = sadd.s32 %s23, %s24
        %p303 = scmp.lt.s32.totalorder %s302, 1
        %s304 = scalar_select %p303, %s302, 1
        %s305 = smul.u32 2, %s304
        %s306 = ssub.s32 3, %s305
        %p307 = scmp.lt.s32.totalorder %s306, 2
        %s308 = scalar_select %p307, %s306, 2
        %s309 = smul.u32 128, %s308
        %p310 = scmp.lt.s32.totalorder %s23, 1
        %s311 = scalar_select %p310, %s23, 1
        %s312 = smul.addr %s311, 8
        %s313 = scalar_lea.vmem %s3, %s312
        %p314 = scmp.lt.s32.totalorder %s23, 1
        %s315 = scalar_select %p314, %s23, 1
        %s316 = smul.addr %s315, 8
        %s317 = scalar_lea.vmem %s4, %s316
        %p318 = scmp.lt.s32.totalorder %s23, 1
        %s319 = scalar_select %p318, %s23, 1
        %s320 = smul.addr %s319, 8
        %s321 = scalar_lea.vmem %s5, %s320
        %p322 = scmp.eq.s32.totalorder %s24, 0
        // Predicated region
        $region45: #{tpu_custom_call.1} parent=31 // pred_check
          %p323 = pneg %p322
        $region46: #{tpu_custom_call.1} parent=31 // pred_check_branch
          %325 = sbr.rel (%p323) target = $region48
        $region47: #{tpu_custom_call.1} parent=31 // pred_region
          %v326 = vld [vmem:[#allocation6] sm:$0xff]
          %v327 = vld [vmem:[#allocation8] sm:$0xff]
          %v328 = vmul.f32 %v326, %v326
          %vm329 = vcmask 261120
          %v330 = vsel %vm329, %v328, 0.0
          %331 = vadd.xlane.f32.xlu0 %v330
          %v332 = vpop.xlane.xlu0 %331
          %v333 = vadd.f32 %v332, 1e-12
          %v334 = vrsqrt.pop %v333
          %v335 = vmul.f32 %v327, %v327
          %v336 = vsel %vm329, %v335, 0.0
          %337 = vadd.xlane.f32.xlu0 %v336
          %v338 = vpop.xlane.xlu0 %337
          %v339 = vadd.f32 %v338, 1e-12
          %v340 = vrsqrt.pop %v339
          %v341 = vmul.f32 %v334, 14.285714
          %v342 = vmul.f32 %v326, %v341
          %343 = vst.msk [vmem:[#allocation2] sm:$0xff] %vm329, %v342
          %v344 = vmul.f32 %v327, %v340
          %v345 = vmul.f32 %v342, %v344
          %v346 = vsel %vm329, %v345, 0.0
          %347 = vadd.xlane.f32.xlu0 %v346
          %v348 = vpop.xlane.xlu0 %347
          %vm349 = vcmask 7168
          %350 = vst.msk [vmem:[#allocation3] sm:$0xff] %vm349, %v348
          %351 = vst.msk [vmem:[#allocation4] sm:$0xff] %vm349, -1e+30
          %352 = vst.msk [vmem:[#allocation5] sm:$0xff] %vm349, 0.0
        $region48: #{tpu_custom_call.1} parent=31 // pred_fallthru
          _
        %v353 = vld [vmem:[%s268] sm:$0xff]
        %v354 = vld [vmem:[%s268 + $0x8] sm:$0xff]
        %v355 = vmul.f32 %v353, %v353
        %v356 = vmul.f32 %v354, %v354
        %vm357 = vcmask 261120
        %v358 = vsel %vm357, %v355, 0.0
        %359 = vadd.xlane.f32.xlu0 %v358
        %v360 = vpop.xlane.xlu0 %359
        %v361 = vsel %vm357, %v356, 0.0
        %362 = vadd.xlane.f32.xlu0 %v361
        %v363 = vpop.xlane.xlu0 %362
        %v364 = vadd.f32 %v360, 1e-12
        %v365 = vadd.f32 %v363, 1e-12
        %v366 = vrsqrt.pop %v364
        %v367 = vrsqrt.pop %v365
        %v368 = vmul.f32 %v353, %v366
        %v369 = vmul.f32 %v354, %v367
        %v370 = vld [vmem:[#allocation2] sm:$0xff]
        %v372 = vsel %vm357, %v370, 0
        %v375 = vsel %vm357, %v368, 0
        %v378 = vsel %vm357, %v369, 0
        %380 = vmatprep.subr.mxu0 0.0
        %381 = vmatpush1.xpose.msra.mxu0 %v375
        %382 = vmatprep.subr.mxu0 0.0
        %383 = vmatpush1.xpose.msra.mxu0 %v378
        %384 = vmatprep.subr.mxu0 0.0
        %385 = vmatpush1.xpose.msra.mxu0 0.0
        %386 = vmatprep.subr.mxu0 0.0
        %387 = vmatpush1.xpose.msra.mxu0 0.0
        %388 = vmatprep.subr.mxu0 0.0
        %389 = vmatpush1.xpose.msra.mxu0 0.0
        %390 = vmatprep.subr.mxu0 0.0
        %391 = vmatpush1.xpose.msra.mxu0 0.0
        %392 = vmatprep.subr.mxu0 0.0
        %393 = vmatpush1.xpose.msra.mxu0 0.0
        %394 = vmatprep.subr.mxu0 0.0
        %395 = vmatpush1.xpose.msra.mxu0 0.0
        %396 = vmatprep.subr.mxu0 0.0
        %397 = vmatpush1.xpose.msra.mxu0 0.0
        %398 = vmatprep.subr.mxu0 0.0
        %399 = vmatpush1.xpose.msra.mxu0 0.0
        %400 = vmatprep.subr.mxu0 0.0
        %401 = vmatpush1.xpose.msra.mxu0 0.0
        %402 = vmatprep.subr.mxu0 0.0
        %403 = vmatpush1.xpose.msra.mxu0 0.0
        %404 = vmatprep.subr.mxu0 0.0
        %405 = vmatpush1.xpose.msra.mxu0 0.0
        %406 = vmatprep.subr.mxu0 0.0
        %407 = vmatpush1.xpose.msra.mxu0 0.0
        %408 = vmatprep.subr.mxu0 0.0
        %409 = vmatpush1.xpose.msra.mxu0 0.0
        %410 = vmatprep.subr.mxu0 0.0
        %411 = vmatpush1.xpose.msra.mxu0 0.0
        %412 = vmatprep.subr.mxu0 0.0
        %413 = vmatpush1.xpose.msra.mxu0 0.0
        %414 = vmatprep.subr.mxu0 0.0
        %415 = vmatpush1.xpose.msra.mxu0 0.0
        %416 = vmatprep.subr.mxu0 0.0
        %417 = vmatpush1.xpose.msra.mxu0 0.0
        %418 = vmatprep.subr.mxu0 0.0
        %419 = vmatpush1.xpose.msra.mxu0 0.0
        %420 = vmatprep.subr.mxu0 0.0
        %421 = vmatpush1.xpose.msra.mxu0 0.0
        %422 = vmatprep.subr.mxu0 0.0
        %423 = vmatpush1.xpose.msra.mxu0 0.0
        %424 = vmatprep.subr.mxu0 0.0
        %425 = vmatpush1.xpose.msra.mxu0 0.0
        %426 = vmatprep.subr.mxu0 0.0
        %427 = vmatpush1.xpose.msra.mxu0 0.0
        %428 = vmatprep.subr.mxu0 0.0
        %429 = vmatpush1.xpose.msra.mxu0 0.0
        %430 = vmatprep.subr.mxu0 0.0
        %431 = vmatpush1.xpose.msra.mxu0 0.0
        %432 = vmatprep.subr.mxu0 0.0
        %433 = vmatpush1.xpose.msra.mxu0 0.0
        %434 = vmatprep.subr.mxu0 0.0
        %435 = vmatpush1.xpose.msra.mxu0 0.0
        %436 = vmatprep.subr.mxu0 0.0
        %437 = vmatpush1.xpose.msra.mxu0 0.0
        %438 = vmatprep.subr.mxu0 0.0
        %439 = vmatpush1.xpose.msra.mxu0 0.0
        %440 = vmatprep.subr.mxu0 0.0
        %441 = vmatpush1.xpose.msra.mxu0 0.0
        %442 = vmatprep.subr.mxu0 0.0
        %443 = vmatpush1.xpose.msra.mxu0 0.0
        %444 = vmatprep.mubr.f32.mxu0 0.0
        %445 = vmatmul.mubr.f32.gmra.mrb[0].mxu0 %v372
        %v446 = vpop.f32.mrb[0].mxu0
        %v447 = vadd.f32 0.0, %v446
        %v448 = vpop.f32.mrb[0].mxu0
        %449 = vdwg.mxu0
        %s450 = sadd.s32 %s23, %s24
        %s451 = smul.u32 %s450, 16
        %v452 = vlaneseq
        %v453 = vand.u32 %v452, 127
        %v454 = vstv %s451
        %v455 = vadd.s32 %v454, %v453
        %vm456 = vcmp.lt.s32.totalorder %v455, 20
        %v457 = vsel %vm456, 1, 0
        %vm458 = vcmp.eq.s32.totalorder %v457, 1
        %v459 = vsel %vm458, %v447, -1e+30
        %v460 = vld [vmem:[#allocation4] sm:$0xff]
        %vm461 = vcmask 130048
        %v462 = vsel %vm461, %v459, -inf
        %463 = vmax.xlane.f32.xlu0 %v462
        %v464 = vpop.xlane.xlu0 %463
        %v465 = vmax.f32 %v460, %v464
        %v466 = vld [vmem:[#allocation5] sm:$0xff]
        %v467 = vsub.f32 %v460, %v465
        %v468 = vmul.f32 %v467, 1.442695
        %v469 = vpow.pop %v468
        %v470 = vmul.f32 %v466, %v469
        %472 = vset.pattern.permute.xlu0 0
        %473 = vperm.xlu0 %472, %v465
        %v474 = vpop.permute.xlu0 %473
        %v476 = vsub.f32 %v459, %v474
        %v477 = vmul.f32 %v476, 1.442695
        %v478 = vpow.pop %v477
        %v479 = vsel %vm461, %v478, 0.0
        %480 = vadd.xlane.f32.xlu0 %v479
        %v481 = vpop.xlane.xlu0 %480
        %v482 = vadd.f32 %v470, %v481
        %vm483 = vcmask 7168
        %484 = vst.msk [vmem:[#allocation5] sm:$0xff] %vm483, %v482
        %485 = vst.msk [vmem:[#allocation4] sm:$0xff] %vm483, %v465
        // Predicated region
        $region49: #{tpu_custom_call.1} parent=31 // pred_check
          %p486 = pneg %p322
        $region50: #{tpu_custom_call.1} parent=31 // pred_check_branch
          %488 = sbr.rel (%p486) target = $region52
        $region51: #{tpu_custom_call.1} parent=31 // pred_region
          %v489 = vld [vmem:[#allocation4] sm:$0xff]
          %490 = vst.msk [vmem:[%s313] sm:$0xff] %vm483, %v489
          %v491 = vld [vmem:[#allocation5] sm:$0xff]
          %492 = vst.msk [vmem:[%s317] sm:$0xff] %vm483, %v491
          %v493 = vld [vmem:[#allocation3] sm:$0xff]
          %494 = vst.msk [vmem:[%s321] sm:$0xff] %vm483, %v493
        $region52: #{tpu_custom_call.1} parent=31 // pred_fallthru
          _
        %p495 = scmp.lt.s32.totalorder %s23, 1
        %s496 = scalar_select %p495, %s23, 1
        %s497 = smul.addr %s496, 8
        %s498 = scalar_lea.vmem %s3, %s497
        %p499 = scmp.lt.s32.totalorder %s23, 1
        %s500 = scalar_select %p499, %s23, 1
        %s501 = smul.addr %s500, 8
        %s502 = scalar_lea.vmem %s4, %s501
        %p503 = scmp.lt.s32.totalorder %s23, 1
        %s504 = scalar_select %p503, %s23, 1
        %s505 = smul.addr %s504, 8
        %s506 = scalar_lea.vmem %s5, %s505
        // Predicated region
        $region53: #{tpu_custom_call.1} parent=31 // pred_check
          %p507 = pneg %p123
        $region54: #{tpu_custom_call.1} parent=31 // pred_check_branch
          %509 = sbr.rel (%p507) target = $region56
        $region55: #{tpu_custom_call.1} parent=31 // pred_region
          _
        $region56: #{tpu_custom_call.1} parent=31 // pred_fallthru
          _
        // Predicated region
        $region57: #{tpu_custom_call.1} parent=31 // pred_check
          %p510 = pneg %p149
        $region58: #{tpu_custom_call.1} parent=31 // pred_check_branch
          %512 = sbr.rel (%p510) target = $region60
        $region59: #{tpu_custom_call.1} parent=31 // pred_region
          _
        $region60: #{tpu_custom_call.1} parent=31 // pred_fallthru
          _
        // Predicated region
        $region61: #{tpu_custom_call.1} parent=31 // pred_check
          %p513 = pneg %p175
        $region62: #{tpu_custom_call.1} parent=31 // pred_check_branch
          %515 = sbr.rel (%p513) target = $region64
        $region63: #{tpu_custom_call.1} parent=31 // pred_region
          _
        $region64: #{tpu_custom_call.1} parent=31 // pred_fallthru
          _
      $region32: #{tpu_custom_call.1} parent=5 // pred_fallthru
        _
      %p516 = scmp.le.s32.totalorder 2, %s14
      // Predicated region
      $region65: #{tpu_custom_call.1} parent=5 // pred_check
        %p517 = pneg %p516
      $region66: #{tpu_custom_call.1} parent=5 // pred_check_branch
        %519 = sbr.rel (%p517) target = $region68
      $region67: #{tpu_custom_call.1} parent=5 // pred_region
        %s520 = ssub.s32 %s14, 2
        // Predicated region
        $region69: #{tpu_custom_call.1} parent=67 // pred_check
          %p521 = pneg %p129
        $region70: #{tpu_custom_call.1} parent=67 // pred_check_branch
          %523 = sbr.rel (%p521) target = $region72
        $region71: #{tpu_custom_call.1} parent=67 // pred_region
          %p524 = scmp.lt.s32.totalorder %s25, 1
          %s525 = scalar_select %p524, %s25, 1
          %s526 = smul.addr %s525, 8
          %s527 = scalar_lea.vmem %s3, %s526
        $region72: #{tpu_custom_call.1} parent=67 // pred_fallthru
          _
        // Predicated region
        $region73: #{tpu_custom_call.1} parent=67 // pred_check
          %p528 = pneg %p155
        $region74: #{tpu_custom_call.1} parent=67 // pred_check_branch
          %530 = sbr.rel (%p528) target = $region76
        $region75: #{tpu_custom_call.1} parent=67 // pred_region
          %p531 = scmp.lt.s32.totalorder %s25, 1
          %s532 = scalar_select %p531, %s25, 1
          %s533 = smul.addr %s532, 8
          %s534 = scalar_lea.vmem %s4, %s533
        $region76: #{tpu_custom_call.1} parent=67 // pred_fallthru
          _
        // Predicated region
        $region77: #{tpu_custom_call.1} parent=67 // pred_check
          %p535 = pneg %p181
        $region78: #{tpu_custom_call.1} parent=67 // pred_check_branch
          %537 = sbr.rel (%p535) target = $region80
        $region79: #{tpu_custom_call.1} parent=67 // pred_region
          %p538 = scmp.lt.s32.totalorder %s25, 1
          %s539 = scalar_select %p538, %s25, 1
          %s540 = smul.addr %s539, 8
          %s541 = scalar_lea.vmem %s5, %s540
        $region80: #{tpu_custom_call.1} parent=67 // pred_fallthru
          _
      $region68: #{tpu_custom_call.1} parent=5 // pred_fallthru
        _
    $region6: #{tpu_custom_call.1} parent=1 // loop_footer
      %s18 = sadd.s32 1, %s14
    $region7: #{tpu_custom_call.1} parent=1 // loop_footer_branch
      %13 = sbr.rel target = $region3
    $region8: #{tpu_custom_call.1} parent=1 // loop_exit
      _
    %542 = vsyncpa [#allocation7], 1
    %s543 = scalar_lea.sflag [#allocation7], 1
    %544 = vsyncpa %s543, 1
    %545 = vsyncpa [#allocation9], 1

</llo_original>
